<compile_context>
chip_gen: v7x
topology: tpu7x:2x2x1
jax: 0.10.0
libtpu: 0.0.40
codegen_flags: <defaults>
</compile_context>

<pallas_src>
import functools
import numpy as np
import jax
import jax.numpy as jnp
from jax.experimental import pallas as pl
from jax.experimental.pallas import tpu as pltpu


# ----------------------------------------------------------------------------
# Kernel
# ----------------------------------------------------------------------------
def _make_kernel(min_bpm: int, max_bpm: int, B: int, T: int):
    def kernel(ab_ref, sig_ref, fr_ref, trig_ref, fnorm_ref, total_ref, mae_ref):
        alpha = ab_ref[0]
        beta = ab_ref[1]

        # sig: (2B, T) -- rows [0, B) are pred, rows [B, 2B) are target
        sig = sig_ref[...]
        mean = jnp.mean(sig, axis=-1, keepdims=True)
        c = sig - mean                                        # centered signals
        ss = jnp.sum(c * c, axis=-1, keepdims=True)           # (2B, 1)

        # --- negative Pearson loss ---------------------------------------
        # Standardizing pred (the module's first step) is shift/scale
        # invariant for Pearson correlation, so compute it on the centered
        # raw signals directly.
        cov = jnp.sum(c[:B] * c[B:], axis=-1, keepdims=True)  # (B, 1)
        corr = cov * jax.lax.rsqrt(ss[:B] * ss[B:])
        rppg_loss = jnp.mean(1.0 - corr)

        # --- bpm mask from per-sample frame rate --------------------------
        fr = fr_ref[...]        # (2B, 1)  frame rate duplicated for both halves
        fnorm = fnorm_ref[...]  # (1, T)   |fftfreq(T, d=1)| = min(k, T-k)/T
        bpm = fr * 60.0 * fnorm
        mask = jnp.logical_and(bpm >= float(min_bpm), bpm <= float(max_bpm))

        # --- DFT magnitudes: one fused bf16 MXU matmul ---------------------
        # The bpm distribution is invariant to per-row scaling, and centering
        # only changes the DC bin, which the mask kills whenever min_bpm > 0,
        # so the centered signals can feed the DFT directly.
        if min_bpm > 0:
            dft_in = c
        else:
            rows = jax.lax.broadcasted_iota(jnp.int32, (2 * B, T), 0)
            dft_in = jnp.where(rows < B, c, sig)

        spec = jnp.dot(dft_in.astype(jnp.bfloat16), trig_ref[...],
                       preferred_element_type=jnp.float32)     # (2B, 2T)
        re = spec[:, :T]
        im = spec[:, T:]
        mag = jnp.sqrt(re * re + im * im)
        mag = jnp.where(mask, mag, 0.0)
        d = mag * pl.reciprocal(jnp.sum(mag, axis=-1, keepdims=True), approx=True)
        d = jnp.maximum(d, 1e-15)                              # torch.clamp(min=1e-15)
        pd = d[:B]
        td = d[B:]

        # --- log_softmax(pred_distribution) -------------------------------
        z = pd - jnp.max(pd, axis=-1, keepdims=True)
        log_sm = z - jnp.log(jnp.sum(jnp.exp(z), axis=-1, keepdims=True))

        # F.kl_div(log_softmax(pd), td, reduction='mean') -> mean over all elems
        kl = jnp.mean(td * (jnp.log(td) - log_sm))

        # first-occurrence argmax along lanes (ties between conjugate bins
        # resolve to the positive-frequency bin because the tables are built
        # with exact symmetry)
        iota = jax.lax.broadcasted_iota(jnp.int32, (2 * B, T), 1)
        dmax = jnp.max(d, axis=-1, keepdims=True)
        args = jnp.min(jnp.where(d == dmax, iota, T), axis=-1, keepdims=True)
        pd_arg = args[:B]
        td_arg = args[B:]

        # F.cross_entropy(pd as logits, argmax(td))
        onehot = (iota[:B] == td_arg).astype(jnp.float32)
        ce = -jnp.mean(jnp.sum(onehot * log_sm, axis=-1, keepdims=True))

        # F.mse_loss(pd, td)
        mse = jnp.mean((pd - td) ** 2)

        total = alpha * rppg_loss + beta * (kl + ce + mse)
        mae = jnp.mean(jnp.abs(pd_arg.astype(jnp.float32) - td_arg.astype(jnp.float32)))

        total_ref[0, 0] = total
        mae_ref[0, 0] = mae

    return kernel


# ----------------------------------------------------------------------------
# Host-side constants, cached per T. Built with exact conjugate symmetry so
# |X_k| == |X_{T-k}| bit-exact even after the bf16 cast (equal/negated table
# entries round identically), keeping first-occurrence argmax deterministic.
# ----------------------------------------------------------------------------
@functools.lru_cache(maxsize=None)
def _dft_tables(T: int):
    m = np.arange(T)
    half = np.minimum(m, T - m).astype(np.float64)
    sign = np.where(m <= T // 2, 1.0, -1.0)
    ang = 2.0 * np.pi * half / T
    cos_tab = np.cos(ang)                 # cos_tab[m] == cos_tab[T-m] bit-exact
    sin_tab = np.sin(ang) * sign          # sin_tab[m] == -sin_tab[T-m] bit-exact
    nk = np.mod(np.outer(m, m), T)
    trig = np.concatenate([cos_tab[nk], sin_tab[nk]], axis=1)   # (T, 2T): [cos | sin]
    fnorm = (np.minimum(m, T - m) / T).reshape(1, T)
    trig = jnp.asarray(trig, dtype=jnp.bfloat16)   # bf16 MXU weights, f32 accumulation
    fnorm = jnp.asarray(fnorm, dtype=jnp.float32)
    return trig, fnorm


# ----------------------------------------------------------------------------
# Jitted wrapper around the pallas_call
# ----------------------------------------------------------------------------
@functools.partial(jax.jit, static_argnames=("min_bpm", "max_bpm"))
def _loss_impl(pred, target, fr, alpha, beta, trig, fnorm, *, min_bpm, max_bpm):
    B, T = pred.shape
    sig = jnp.concatenate([pred, target], axis=0)     # (2B, T)
    fr2 = jnp.concatenate([fr, fr], axis=0)           # (2B, 1)
    ab = jnp.stack([jnp.float32(alpha), jnp.float32(beta)])

    kernel = _make_kernel(int(min_bpm), int(max_bpm), B, T)
    total, mae = pl.pallas_call(
        kernel,
        grid=(1,),
        in_specs=[
            pl.BlockSpec(memory_space=pltpu.MemorySpace.SMEM),   # [alpha, beta]
            pl.BlockSpec((2 * B, T), lambda i: (0, 0)),          # stacked pred/target
            pl.BlockSpec((2 * B, 1), lambda i: (0, 0)),          # frame rate (dup'd)
            pl.BlockSpec((T, 2 * T), lambda i: (0, 0)),          # fused [cos | sin] DFT table
            pl.BlockSpec((1, T), lambda i: (0, 0)),              # |fftfreq| (d=1)
        ],
        out_specs=(pl.BlockSpec(memory_space=pltpu.MemorySpace.SMEM),
                   pl.BlockSpec(memory_space=pltpu.MemorySpace.SMEM)),
        out_shape=(jax.ShapeDtypeStruct((1, 1), jnp.float32),
                   jax.ShapeDtypeStruct((1, 1), jnp.float32)),
        compiler_params=pltpu.CompilerParams(dimension_semantics=("arbitrary",)),
    )(ab, sig, fr2, trig, fnorm)
    return total[0, 0], mae[0, 0]


def combined_label_distribution_loss(pred, target, frame_rate, alpha, beta,
                                     min_bpm=40, max_bpm=180):
    pred = jnp.asarray(pred, jnp.float32)
    target = jnp.asarray(target, jnp.float32)
    B, T = pred.shape
    fr = jnp.asarray(frame_rate, jnp.float32).reshape(B, 1)
    trig, fnorm = _dft_tables(T)
    total, mae = _loss_impl(pred, target, fr, float(alpha), float(beta), trig, fnorm,
                            min_bpm=int(min_bpm), max_bpm=int(max_bpm))
    return {"total_loss": total, "bpm_mae": mae}


# ----------------------------------------------------------------------------
# Pure numpy reference (float64), mirrors the PyTorch module exactly
# ----------------------------------------------------------------------------
def _reference_numpy(pred, target, frame_rate, alpha, beta, min_bpm, max_bpm):
    pred = pred.astype(np.float64)
    target = target.astype(np.float64)
    fr = frame_rate.astype(np.float64)
    B, T = pred.shape
    mean = pred.mean(-1, keepdims=True)
    std = np.sqrt(((pred - mean) ** 2).sum(-1, keepdims=True) / (T - 1))
    pred = (pred - mean) / std

    pc = pred - pred.mean(-1, keepdims=True)
    tc = target - target.mean(-1, keepdims=True)
    corr = (pc * tc).sum(-1) / (np.sqrt((pc ** 2).sum(-1)) * np.sqrt((tc ** 2).sum(-1)))
    rppg = (1.0 - corr).mean()

    def dist(sig):
        fft = np.fft.fft(sig, axis=-1)
        freq = np.stack([np.fft.fftfreq(T, d=1.0 / f) for f in fr])
        bpm = np.abs(freq * 60.0)
        m = (bpm >= min_bpm) & (bpm <= max_bpm)
        mag = np.abs(np.where(m, fft, 0.0))
        d = mag / mag.sum(-1, keepdims=True)
        return np.clip(d, 1e-15, None)

    pd = dist(pred)
    td = dist(target)
    z = pd - pd.max(-1, keepdims=True)
    log_sm = z - np.log(np.exp(z).sum(-1, keepdims=True))
    kl = (td * (np.log(td) - log_sm)).mean()
    td_arg = td.argmax(-1)
    pd_arg = pd.argmax(-1)
    ce = -log_sm[np.arange(B), td_arg].mean()
    mse = ((pd - td) ** 2).mean()
    total = alpha * rppg + beta * (kl + ce + mse)
    mae = np.abs(pd_arg.astype(np.float64) - td_arg.astype(np.float64)).mean()
    return float(total), float(mae)


# ----------------------------------------------------------------------------
if __name__ == "__main__":
    B, T = 4, 128
    MIN_BPM, MAX_BPM = 40, 180
    key = jax.random.PRNGKey(0)
    k1, k2 = jax.random.split(key)

    t = jnp.arange(T, dtype=jnp.float32)
    hr_hz = jnp.array([1.2, 1.5, 1.9, 1.0], dtype=jnp.float32)          # 72/90/114/60 bpm
    frame_rate = jnp.array([30.0, 25.0, 30.0, 20.0], dtype=jnp.float32)
    clean = jnp.sin(2.0 * jnp.pi * hr_hz[:, None] * t[None, :] / frame_rate[:, None])
    target = clean + 0.1 * jax.random.normal(k1, (B, T), jnp.float32)
    pred = clean + 0.5 * jax.random.normal(k2, (B, T), jnp.float32)
    alpha, beta = 1.0, 0.5

    out = combined_label_distribution_loss(pred, target, frame_rate, alpha, beta,
                                           MIN_BPM, MAX_BPM)
    jax.block_until_ready((out["total_loss"], out["bpm_mae"]))
    total = float(out["total_loss"])
    mae = float(out["bpm_mae"])

    ref_total, ref_mae = _reference_numpy(np.asarray(pred), np.asarray(target),
                                          np.asarray(frame_rate), alpha, beta,
                                          MIN_BPM, MAX_BPM)
    assert np.isfinite(total) and np.isfinite(mae)
    assert abs(total - ref_total) <= 2e-2 * (1.0 + abs(ref_total)), (total, ref_total)
    # bpm_mae depends on argmax tie-breaking between conjugate-symmetric FFT bins,
    # which may legitimately differ between FFT backends; only sanity-check range.
    assert 0.0 <= mae < T
    print("KERNEL_OK")
</pallas_src>

<mosaic_0001>
module attributes {stable_mosaic.version = 11 : i64} {
  func.func @kernel(%arg0: i32, %arg1: memref<2xf32, #tpu.memory_space<smem>>, %arg2: memref<8x128xf32, #tpu.memory_space<vmem>>, %arg3: memref<8x1xf32, #tpu.memory_space<vmem>>, %arg4: memref<128x256xbf16, #tpu.memory_space<vmem>>, %arg5: memref<1x128xf32, #tpu.memory_space<vmem>>, %arg6: memref<1x1xf32, #tpu.memory_space<smem>>, %arg7: memref<1x1xf32, #tpu.memory_space<smem>>) attributes {dimension_semantics = [#tpu.dimension_semantics<arbitrary>], iteration_bounds = array<i64: 1>, scalar_prefetch = 0 : i64, scratch_operands = 0 : i64, tpu.core_type = #tpu.core_type<tc>, window_params = [{transform_indices = @transform_0, window_bounds = array<i64: 2>}, {pipeline_mode = #tpu.pipeline_mode<synchronous>, transform_indices = @transform_1, window_bounds = array<i64: 8, 128>}, {pipeline_mode = #tpu.pipeline_mode<synchronous>, transform_indices = @transform_2, window_bounds = array<i64: 8, 1>}, {pipeline_mode = #tpu.pipeline_mode<synchronous>, transform_indices = @transform_3, window_bounds = array<i64: 128, 256>}, {pipeline_mode = #tpu.pipeline_mode<synchronous>, transform_indices = @transform_4, window_bounds = array<i64: 1, 128>}, {transform_indices = @transform_5, window_bounds = array<i64: 1, 1>}, {transform_indices = @transform_6, window_bounds = array<i64: 1, 1>}]} {
    %c0 = arith.constant 0 : index
    %0 = memref.load %arg1[%c0] : memref<2xf32, #tpu.memory_space<smem>>
    %c1 = arith.constant 1 : index
    %1 = memref.load %arg1[%c1] : memref<2xf32, #tpu.memory_space<smem>>
    %c0_0 = arith.constant 0 : index
    %c0_1 = arith.constant 0 : index
    %2 = vector.load %arg2[%c0_0, %c0_1] : memref<8x128xf32, #tpu.memory_space<vmem>>, vector<8x128xf32>
    %cst = arith.constant dense<0.000000e+00> : vector<8xf32>
    %3 = vector.multi_reduction <add>, %2, %cst [1] : vector<8x128xf32> to vector<8xf32>
    %4 = vector.shape_cast %3 : vector<8xf32> to vector<8x1xf32>
    %cst_2 = arith.constant 1.280000e+02 : f32
    %5 = vector.broadcast %cst_2 : f32 to vector<8x1xf32>
    %6 = arith.divf %4, %5 : vector<8x1xf32>
    %7 = vector.broadcast %6 : vector<8x1xf32> to vector<8x128xf32>
    %8 = arith.subf %2, %7 : vector<8x128xf32>
    %9 = arith.mulf %8, %8 : vector<8x128xf32>
    %cst_3 = arith.constant dense<0.000000e+00> : vector<8xf32>
    %10 = vector.multi_reduction <add>, %9, %cst_3 [1] : vector<8x128xf32> to vector<8xf32>
    %11 = vector.shape_cast %10 : vector<8xf32> to vector<8x1xf32>
    %12 = vector.extract_strided_slice %8 {offsets = [0, 0], sizes = [4, 128], strides = [1, 1]} : vector<8x128xf32> to vector<4x128xf32>
    %13 = vector.extract_strided_slice %8 {offsets = [4, 0], sizes = [4, 128], strides = [1, 1]} : vector<8x128xf32> to vector<4x128xf32>
    %14 = arith.mulf %12, %13 : vector<4x128xf32>
    %cst_4 = arith.constant dense<0.000000e+00> : vector<4xf32>
    %15 = vector.multi_reduction <add>, %14, %cst_4 [1] : vector<4x128xf32> to vector<4xf32>
    %16 = vector.shape_cast %15 : vector<4xf32> to vector<4x1xf32>
    %17 = vector.extract_strided_slice %11 {offsets = [0, 0], sizes = [4, 1], strides = [1, 1]} : vector<8x1xf32> to vector<4x1xf32>
    %18 = vector.extract_strided_slice %11 {offsets = [4, 0], sizes = [4, 1], strides = [1, 1]} : vector<8x1xf32> to vector<4x1xf32>
    %19 = arith.mulf %17, %18 : vector<4x1xf32>
    %20 = math.rsqrt %19 : vector<4x1xf32>
    %21 = arith.mulf %16, %20 : vector<4x1xf32>
    %cst_5 = arith.constant 1.000000e+00 : f32
    %22 = vector.broadcast %cst_5 : f32 to vector<4x1xf32>
    %23 = arith.subf %22, %21 : vector<4x1xf32>
    %24 = vector.shape_cast %23 : vector<4x1xf32> to vector<1x4x1xf32>
    %cst_6 = arith.constant dense<0.000000e+00> : vector<1xf32>
    %25 = vector.multi_reduction <add>, %24, %cst_6 [1, 2] : vector<1x4x1xf32> to vector<1xf32>
    %26 = vector.shape_cast %25 : vector<1xf32> to vector<1x1x1xf32>
    %27 = vector.extract %26[0, 0, 0] : f32 from vector<1x1x1xf32>
    %cst_7 = arith.constant 4.000000e+00 : f32
    %28 = arith.divf %27, %cst_7 : f32
    %c0_8 = arith.constant 0 : index
    %c0_9 = arith.constant 0 : index
    %29 = vector.load %arg3[%c0_8, %c0_9] : memref<8x1xf32, #tpu.memory_space<vmem>>, vector<8x1xf32>
    %c0_10 = arith.constant 0 : index
    %c0_11 = arith.constant 0 : index
    %30 = vector.load %arg5[%c0_10, %c0_11] : memref<1x128xf32, #tpu.memory_space<vmem>>, vector<1x128xf32>
    %cst_12 = arith.constant 6.000000e+01 : f32
    %31 = vector.broadcast %cst_12 : f32 to vector<8x1xf32>
    %32 = arith.mulf %29, %31 : vector<8x1xf32>
    %33 = vector.broadcast %32 : vector<8x1xf32> to vector<8x128xf32>
    %34 = vector.broadcast %30 : vector<1x128xf32> to vector<8x128xf32>
    %35 = arith.mulf %33, %34 : vector<8x128xf32>
    %cst_13 = arith.constant 4.000000e+01 : f32
    %36 = vector.broadcast %cst_13 : f32 to vector<8x128xf32>
    %37 = arith.cmpf oge, %35, %36 : vector<8x128xf32>
    %cst_14 = arith.constant 1.800000e+02 : f32
    %38 = vector.broadcast %cst_14 : f32 to vector<8x128xf32>
    %39 = arith.cmpf ole, %35, %38 : vector<8x128xf32>
    %40 = arith.andi %37, %39 : vector<8x128xi1>
    %41 = arith.truncf %8 : vector<8x128xf32> to vector<8x128xbf16>
    %c0_15 = arith.constant 0 : index
    %c0_16 = arith.constant 0 : index
    %42 = vector.load %arg4[%c0_15, %c0_16] : memref<128x256xbf16, #tpu.memory_space<vmem>>, vector<128x256xbf16>
    %cst_17 = arith.constant dense<0.000000e+00> : vector<8x256xf32>
    %43 = tpu.matmul %41, %42, %cst_17 {dimension_numbers = #tpu.dot_dimension_numbers<[1], [0], [0], [1], [0, 0, 1, 1], [], []>} : vector<8x128xbf16>, vector<128x256xbf16>, vector<8x256xf32> -> vector<8x256xf32>
    %44 = vector.extract_strided_slice %43 {offsets = [0, 0], sizes = [8, 128], strides = [1, 1]} : vector<8x256xf32> to vector<8x128xf32>
    %45 = vector.extract_strided_slice %43 {offsets = [0, 128], sizes = [8, 128], strides = [1, 1]} : vector<8x256xf32> to vector<8x128xf32>
    %46 = arith.mulf %44, %44 : vector<8x128xf32>
    %47 = arith.mulf %45, %45 : vector<8x128xf32>
    %48 = arith.addf %46, %47 : vector<8x128xf32>
    %49 = math.sqrt %48 : vector<8x128xf32>
    %cst_18 = arith.constant 0.000000e+00 : f32
    %50 = vector.broadcast %cst_18 : f32 to vector<8x128xf32>
    %51 = arith.select %40, %49, %50 : vector<8x128xi1>, vector<8x128xf32>
    %cst_19 = arith.constant dense<0.000000e+00> : vector<8xf32>
    %52 = vector.multi_reduction <add>, %51, %cst_19 [1] : vector<8x128xf32> to vector<8xf32>
    %53 = vector.shape_cast %52 : vector<8xf32> to vector<8x1xf32>
    %54 = tpu.reciprocal %53 {approx = true} : vector<8x1xf32> -> vector<8x1xf32>
    %55 = vector.broadcast %54 : vector<8x1xf32> to vector<8x128xf32>
    %56 = arith.mulf %51, %55 : vector<8x128xf32>
    %cst_20 = arith.constant 1.000000e-15 : f32
    %57 = vector.broadcast %cst_20 : f32 to vector<8x128xf32>
    %58 = arith.maximumf %56, %57 : vector<8x128xf32>
    %59 = vector.extract_strided_slice %58 {offsets = [0, 0], sizes = [4, 128], strides = [1, 1]} : vector<8x128xf32> to vector<4x128xf32>
    %60 = vector.extract_strided_slice %58 {offsets = [4, 0], sizes = [4, 128], strides = [1, 1]} : vector<8x128xf32> to vector<4x128xf32>
    %cst_21 = arith.constant dense<0xFF800000> : vector<4xf32>
    %61 = vector.multi_reduction <maximumf>, %59, %cst_21 [1] : vector<4x128xf32> to vector<4xf32>
    %62 = vector.shape_cast %61 : vector<4xf32> to vector<4x1xf32>
    %63 = vector.broadcast %62 : vector<4x1xf32> to vector<4x128xf32>
    %64 = arith.subf %59, %63 : vector<4x128xf32>
    %65 = math.exp %64 : vector<4x128xf32>
    %cst_22 = arith.constant dense<0.000000e+00> : vector<4xf32>
    %66 = vector.multi_reduction <add>, %65, %cst_22 [1] : vector<4x128xf32> to vector<4xf32>
    %67 = vector.shape_cast %66 : vector<4xf32> to vector<4x1xf32>
    %68 = math.log %67 : vector<4x1xf32>
    %69 = vector.broadcast %68 : vector<4x1xf32> to vector<4x128xf32>
    %70 = arith.subf %64, %69 : vector<4x128xf32>
    %71 = math.log %60 : vector<4x128xf32>
    %72 = arith.subf %71, %70 : vector<4x128xf32>
    %73 = arith.mulf %60, %72 : vector<4x128xf32>
    %74 = vector.shape_cast %73 : vector<4x128xf32> to vector<1x4x128xf32>
    %cst_23 = arith.constant dense<0.000000e+00> : vector<1xf32>
    %75 = vector.multi_reduction <add>, %74, %cst_23 [1, 2] : vector<1x4x128xf32> to vector<1xf32>
    %76 = vector.shape_cast %75 : vector<1xf32> to vector<1x1x1xf32>
    %77 = vector.extract %76[0, 0, 0] : f32 from vector<1x1x1xf32>
    %cst_24 = arith.constant 5.120000e+02 : f32
    %78 = arith.divf %77, %cst_24 : f32
    %79 = tpu.iota {dimensions = array<i32: 1>} : vector<8x128xi32>
    %cst_25 = arith.constant dense<0xFF800000> : vector<8xf32>
    %80 = vector.multi_reduction <maximumf>, %58, %cst_25 [1] : vector<8x128xf32> to vector<8xf32>
    %81 = vector.shape_cast %80 : vector<8xf32> to vector<8x1xf32>
    %82 = vector.broadcast %81 : vector<8x1xf32> to vector<8x128xf32>
    %83 = arith.cmpf oeq, %58, %82 : vector<8x128xf32>
    %c128_i32 = arith.constant 128 : i32
    %84 = vector.broadcast %c128_i32 : i32 to vector<8x128xi32>
    %85 = arith.select %83, %79, %84 : vector<8x128xi1>, vector<8x128xi32>
    %cst_26 = arith.constant dense<2147483647> : vector<8xi32>
    %86 = vector.multi_reduction <minsi>, %85, %cst_26 [1] : vector<8x128xi32> to vector<8xi32>
    %87 = vector.shape_cast %86 : vector<8xi32> to vector<8x1xi32>
    %88 = vector.extract_strided_slice %87 {offsets = [0, 0], sizes = [4, 1], strides = [1, 1]} : vector<8x1xi32> to vector<4x1xi32>
    %89 = vector.extract_strided_slice %87 {offsets = [4, 0], sizes = [4, 1], strides = [1, 1]} : vector<8x1xi32> to vector<4x1xi32>
    %90 = vector.extract_strided_slice %79 {offsets = [0, 0], sizes = [4, 128], strides = [1, 1]} : vector<8x128xi32> to vector<4x128xi32>
    %91 = vector.broadcast %89 : vector<4x1xi32> to vector<4x128xi32>
    %92 = arith.cmpi eq, %90, %91 : vector<4x128xi32>
    %93 = arith.extui %92 : vector<4x128xi1> to vector<4x128xi32>
    %94 = arith.sitofp %93 : vector<4x128xi32> to vector<4x128xf32>
    %95 = arith.mulf %94, %70 : vector<4x128xf32>
    %cst_27 = arith.constant dense<0.000000e+00> : vector<4xf32>
    %96 = vector.multi_reduction <add>, %95, %cst_27 [1] : vector<4x128xf32> to vector<4xf32>
    %97 = vector.shape_cast %96 : vector<4xf32> to vector<4x1xf32>
    %98 = vector.shape_cast %97 : vector<4x1xf32> to vector<1x4x1xf32>
    %cst_28 = arith.constant dense<0.000000e+00> : vector<1xf32>
    %99 = vector.multi_reduction <add>, %98, %cst_28 [1, 2] : vector<1x4x1xf32> to vector<1xf32>
    %100 = vector.shape_cast %99 : vector<1xf32> to vector<1x1x1xf32>
    %101 = vector.extract %100[0, 0, 0] : f32 from vector<1x1x1xf32>
    %cst_29 = arith.constant 4.000000e+00 : f32
    %102 = arith.divf %101, %cst_29 : f32
    %cst_30 = arith.constant 0.000000e+00 : f32
    %103 = arith.subf %cst_30, %102 : f32
    %104 = arith.subf %59, %60 : vector<4x128xf32>
    %105 = arith.mulf %104, %104 : vector<4x128xf32>
    %106 = vector.shape_cast %105 : vector<4x128xf32> to vector<1x4x128xf32>
    %cst_31 = arith.constant dense<0.000000e+00> : vector<1xf32>
    %107 = vector.multi_reduction <add>, %106, %cst_31 [1, 2] : vector<1x4x128xf32> to vector<1xf32>
    %108 = vector.shape_cast %107 : vector<1xf32> to vector<1x1x1xf32>
    %109 = vector.extract %108[0, 0, 0] : f32 from vector<1x1x1xf32>
    %cst_32 = arith.constant 5.120000e+02 : f32
    %110 = arith.divf %109, %cst_32 : f32
    %111 = arith.mulf %0, %28 : f32
    %112 = arith.addf %78, %103 : f32
    %113 = arith.addf %112, %110 : f32
    %114 = arith.mulf %1, %113 : f32
    %115 = arith.addf %111, %114 : f32
    %116 = arith.sitofp %88 : vector<4x1xi32> to vector<4x1xf32>
    %117 = arith.sitofp %89 : vector<4x1xi32> to vector<4x1xf32>
    %118 = arith.subf %116, %117 : vector<4x1xf32>
    %119 = math.absf %118 : vector<4x1xf32>
    %120 = vector.shape_cast %119 : vector<4x1xf32> to vector<1x4x1xf32>
    %cst_33 = arith.constant dense<0.000000e+00> : vector<1xf32>
    %121 = vector.multi_reduction <add>, %120, %cst_33 [1, 2] : vector<1x4x1xf32> to vector<1xf32>
    %122 = vector.shape_cast %121 : vector<1xf32> to vector<1x1x1xf32>
    %123 = vector.extract %122[0, 0, 0] : f32 from vector<1x1x1xf32>
    %cst_34 = arith.constant 4.000000e+00 : f32
    %124 = arith.divf %123, %cst_34 : f32
    %c0_35 = arith.constant 0 : index
    %c0_36 = arith.constant 0 : index
    %125 = memref.load %arg6[%c0_35, %c0_36] : memref<1x1xf32, #tpu.memory_space<smem>>
    memref.store %115, %arg6[%c0_35, %c0_36] : memref<1x1xf32, #tpu.memory_space<smem>>
    %c0_37 = arith.constant 0 : index
    %c0_38 = arith.constant 0 : index
    %126 = memref.load %arg7[%c0_37, %c0_38] : memref<1x1xf32, #tpu.memory_space<smem>>
    memref.store %124, %arg7[%c0_37, %c0_38] : memref<1x1xf32, #tpu.memory_space<smem>>
    return
  }
  func.func @transform_0(%arg0: i32) -> i32 {
    %c0_i32 = arith.constant 0 : i32
    %c0_i32_0 = arith.constant 0 : i32
    return %c0_i32 : i32
  }
  func.func @transform_1(%arg0: i32) -> (i32, i32) {
    %c0_i32 = arith.constant 0 : i32
    %c0_i32_0 = arith.constant 0 : i32
    %c0_i32_1 = arith.constant 0 : i32
    return %c0_i32, %c0_i32_0 : i32, i32
  }
  func.func @transform_2(%arg0: i32) -> (i32, i32) {
    %c0_i32 = arith.constant 0 : i32
    %c0_i32_0 = arith.constant 0 : i32
    %c0_i32_1 = arith.constant 0 : i32
    return %c0_i32, %c0_i32_0 : i32, i32
  }
  func.func @transform_3(%arg0: i32) -> (i32, i32) {
    %c0_i32 = arith.constant 0 : i32
    %c0_i32_0 = arith.constant 0 : i32
    %c0_i32_1 = arith.constant 0 : i32
    return %c0_i32, %c0_i32_0 : i32, i32
  }
  func.func @transform_4(%arg0: i32) -> (i32, i32) {
    %c0_i32 = arith.constant 0 : i32
    %c0_i32_0 = arith.constant 0 : i32
    %c0_i32_1 = arith.constant 0 : i32
    return %c0_i32, %c0_i32_0 : i32, i32
  }
  func.func @transform_5(%arg0: i32) -> (i32, i32) {
    %c0_i32 = arith.constant 0 : i32
    %c0_i32_0 = arith.constant 0 : i32
    %c0_i32_1 = arith.constant 0 : i32
    return %c0_i32, %c0_i32_0 : i32, i32
  }
  func.func @transform_6(%arg0: i32) -> (i32, i32) {
    %c0_i32 = arith.constant 0 : i32
    %c0_i32_0 = arith.constant 0 : i32
    %c0_i32_1 = arith.constant 0 : i32
    return %c0_i32, %c0_i32_0 : i32, i32
  }
}

</mosaic_0001>

<llo_original>
// kernel: _loss_impl.1
$region0: #{_loss_impl.1}
  #allocation0 [shape = 'u32[]', space=smem, size = 0x4, offset = 0x4, fixed_abs, tag = 'smem constant byte address 0x4 - core index']
  #allocation1 [shape = 'u32[144,128]{1,0:T(1,128)}', space=vmem, size = 0x12000, scoped, tag = 'internal scratch']
  %s0 = inlined_call_operand.vmem [shape: f32[2], index: 0, kind: input, shape index: {}]
  %s1 = inlined_call_operand.vmem [shape: f32[8,128], index: 1, kind: input, shape index: {}]
  %s2 = inlined_call_operand.vmem [shape: f32[8,1], index: 2, kind: input, shape index: {}]
  %s3 = inlined_call_operand.hbm [shape: bf16[128,256], index: 3, kind: input, shape index: {}]
  %s4 = inlined_call_operand.vmem [shape: f32[1,128], index: 4, kind: input, shape index: {}]
  %s5 = inlined_call_operand.hbm [shape: f32[1,1], index: 5, kind: output, shape index: {0}]
  %s6 = inlined_call_operand.hbm [shape: f32[1,1], index: 6, kind: output, shape index: {1}]
  %7 = xla_tuple %s5, %s6
  %s8 = sld [smem:[#allocation0]]
  $region46: #{_loss_impl.1} parent=0
    _
  %s10 = ssub.s32 1, %s8
  %s11 = scalar_select 0, %s10, %s8
  $region1: #{_loss_impl.1} parent=0
    #allocation2 [shape = 'u8[512]{0}', space=smem, size = 0x200, scoped, tag = 'input window, operand 0, single buffered']
    #allocation3 [shape = 's32[1]{0}', space=sflag, size = 0x4, scoped, tag = 'scoped memory for _loss_impl.1']
    #allocation4 [shape = 's32[1]{0}', space=sflag, size = 0x4, scoped, tag = 'scoped memory for _loss_impl.1']
    #allocation5 [shape = 's32[1]{0}', space=sflag, size = 0x4, scoped, tag = 'scoped memory for _loss_impl.1']
    #allocation6 [shape = 'u8[65536]{0}', space=vmem, size = 0x10000, scoped, tag = 'input window, operand 3, single buffered']
    #allocation7 [shape = 'u8[512]{0}', space=smem, size = 0x200, scoped, tag = 'output window, operand 0, single buffered']
    #allocation8 [shape = 'u8[512]{0}', space=smem, size = 0x200, scoped, tag = 'output window, operand 1, single buffered']
    #allocation9 [shape = 's32[1]{0}', space=sflag, size = 0x4, scoped, tag = 'scoped memory for _loss_impl.1']
    %12 = vsyncpa [#allocation5], 0
    %13 = vsyncpa [#allocation3], 0
    %14 = vsyncpa [#allocation4], 0
    %15 = vsyncpa [#allocation9], 0
    // Predicated region
    $region2: #{_loss_impl.1} parent=1 // pred_check
      _
    $region3: #{_loss_impl.1} parent=1 // pred_check_branch
      %17 = sbr.rel (0) target = $region5
    $region4: #{_loss_impl.1} parent=1 // pred_region
      %s19 = ssub.s32 16, 16
      %20 = vsyncadd [#allocation5], %s19
      %s22 = sshll.u32 %s0, 4
      %s23 = int_to_ptr.vmem [resolvable:$true] %s22
      %25 = dma.vmem_to_smem %s23, 16, [#allocation2], [#allocation5]
    $region5: #{_loss_impl.1} parent=1 // pred_fallthru
      _
    // Predicated region
    $region6: #{_loss_impl.1} parent=1 // pred_check
      _
    $region7: #{_loss_impl.1} parent=1 // pred_check_branch
      %27 = sbr.rel (0) target = $region9
    $region8: #{_loss_impl.1} parent=1 // pred_region
      _
    $region9: #{_loss_impl.1} parent=1 // pred_fallthru
      _
    // Predicated region
    $region10: #{_loss_impl.1} parent=1 // pred_check
      _
    $region11: #{_loss_impl.1} parent=1 // pred_check_branch
      %29 = sbr.rel (0) target = $region13
    $region12: #{_loss_impl.1} parent=1 // pred_region
      _
    $region13: #{_loss_impl.1} parent=1 // pred_fallthru
      _
    // Predicated region
    $region14: #{_loss_impl.1} parent=1 // pred_check
      _
    $region15: #{_loss_impl.1} parent=1 // pred_check_branch
      %31 = sbr.rel (0) target = $region17
    $region16: #{_loss_impl.1} parent=1 // pred_region
      %s33 = ssub.s32 2048, 2048
      %34 = vsyncadd [#allocation3], %s33
      %s35 = sshll.u32 [#allocation6], 4
      %s36 = int_to_ptr.vmem [resolvable:$true] %s35
      %41 = dma.hbm_to_vmem [thread:$0]  %s3, 2048, %s36, [#allocation3], 128, 128, 8
    $region17: #{_loss_impl.1} parent=1 // pred_fallthru
      _
    // Predicated region
    $region18: #{_loss_impl.1} parent=1 // pred_check
      _
    $region19: #{_loss_impl.1} parent=1 // pred_check_branch
      %43 = sbr.rel (0) target = $region21
    $region20: #{_loss_impl.1} parent=1 // pred_region
      _
    $region21: #{_loss_impl.1} parent=1 // pred_fallthru
      _
    // Predicated region
    $region22: #{_loss_impl.1} parent=1 // pred_check
      _
    $region23: #{_loss_impl.1} parent=1 // pred_check_branch
      %45 = sbr.rel (0) target = $region25
    $region24: #{_loss_impl.1} parent=1 // pred_region
      %46 = dma.done [#allocation5], 16
    $region25: #{_loss_impl.1} parent=1 // pred_fallthru
      _
    // Predicated region
    $region26: #{_loss_impl.1} parent=1 // pred_check
      _
    $region27: #{_loss_impl.1} parent=1 // pred_check_branch
      %48 = sbr.rel (0) target = $region29
    $region28: #{_loss_impl.1} parent=1 // pred_region
      %49 = dma.done [#allocation3], 2048
    $region29: #{_loss_impl.1} parent=1 // pred_fallthru
      _
    %50 = sfence
    %s52 = sld [smem:[#allocation2]]
    %s53 = sld [smem:[#allocation2 + $0x1]]
    %v54 = vld [vmem:[%s1] sm:$0xff]
    %55 = vadd.xlane.f32.xlu0 %v54
    %v56 = vpop.xlane.xlu0 %55
    %v57 = vrcp.pop 128.0
    %v58 = vmul.f32 %v56, %v57
    %v59 = vsub.f32 %v54, %v58
    %v60 = vmul.f32 %v59, %v59
    %61 = vadd.xlane.f32.xlu0 %v60
    %v62 = vpop.xlane.xlu0 %61
    %v64 = vrot.slane %v59, 4
    %v66 = vmul.f32 %v59, %v64
    %vm67 = vcmask 1043456
    %v68 = vsel %vm67, %v66, 0.0
    %69 = vadd.xlane.f32.xlu0 %v68
    %v70 = vpop.xlane.xlu0 %69
    %v72 = vrot.slane %v62, 4
    %v74 = vmul.f32 %v62, %v72
    %v75 = vrsqrt.pop %v74
    %v76 = vmul.f32 %v70, %v75
    %v77 = vsub.f32 1.0, %v76
    %vm78 = vcmask 3072
    %v79 = vsel %vm78, %v77, 0.0
    %80 = vadd.xlane.f32.xlu0 %v79
    %v81 = vpop.xlane.xlu0 %80
    %v82 = vrot.slane %v81, 4
    %v83 = vadd.f32 %v81, %v82
    %v84 = vrot.slane %v83, 2
    %v85 = vadd.f32 %v83, %v84
    %v86 = vrot.slane %v85, 1
    %v87 = vadd.f32 %v85, %v86
    %s88 = vtos %v87
    %v89 = vrcp.pop 4.0
    %s90 = vtos %v89
    %s91 = smul.f32 %s88, %s90
    %v92 = vld [vmem:[%s2] sm:$0xff]
    %v93 = vld [vmem:[%s4] sm:$0x1]
    %v94 = vmul.f32 %v92, 60.0
    %96 = vset.pattern.permute.xlu0 0
    %97 = vperm.xlu0 %96, %v94
    %v98 = vpop.permute.xlu0 %97
    %v101 = vlaneseq
    %v102 = vshrl.u32 %v101, 7
    %v103 = vsub.s32 0, %v102
    %v104 = vrot.slane %v93, %v103
    %v106 = vmul.f32 %v98, %v104
    %vm107 = vcmp.ge.f32.partialorder %v106, 40.0
    %vm108 = vcmp.le.f32.partialorder %v106, 180.0
    %vm109 = vmand %vm107, %vm108
    %v110 = vpack.c.bf16 %v59, %v59
    %v111 = vld [vmem:[#allocation6] sm:$0xff]
    %v112 = vld [vmem:[#allocation6 + $0x8] sm:$0xff]
    %v113 = vld [vmem:[#allocation6 + $0x10] sm:$0xff]
    %v114 = vld [vmem:[#allocation6 + $0x18] sm:$0xff]
    %v115 = vld [vmem:[#allocation6 + $0x20] sm:$0xff]
    %v116 = vld [vmem:[#allocation6 + $0x28] sm:$0xff]
    %v117 = vld [vmem:[#allocation6 + $0x30] sm:$0xff]
    %v118 = vld [vmem:[#allocation6 + $0x38] sm:$0xff]
    %v119 = vld [vmem:[#allocation6 + $0x40] sm:$0xff]
    %v120 = vld [vmem:[#allocation6 + $0x48] sm:$0xff]
    %v121 = vld [vmem:[#allocation6 + $0x50] sm:$0xff]
    %v122 = vld [vmem:[#allocation6 + $0x58] sm:$0xff]
    %v123 = vld [vmem:[#allocation6 + $0x60] sm:$0xff]
    %v124 = vld [vmem:[#allocation6 + $0x68] sm:$0xff]
    %v125 = vld [vmem:[#allocation6 + $0x70] sm:$0xff]
    %v126 = vld [vmem:[#allocation6 + $0x78] sm:$0xff]
    %v143 = vunpack.c.l.b16 %v111
    %v144 = vunpack.c.h.b16 %v111
    %v145 = vunpack.c.l.b16 %v112
    %v146 = vunpack.c.h.b16 %v112
    %v147 = vunpack.c.l.b16 %v113
    %v148 = vunpack.c.h.b16 %v113
    %v149 = vunpack.c.l.b16 %v114
    %v150 = vunpack.c.h.b16 %v114
    %v151 = vunpack.c.l.b16 %v115
    %v152 = vunpack.c.h.b16 %v115
    %v153 = vunpack.c.l.b16 %v116
    %v154 = vunpack.c.h.b16 %v116
    %v155 = vunpack.c.l.b16 %v117
    %v156 = vunpack.c.h.b16 %v117
    %v157 = vunpack.c.l.b16 %v118
    %v158 = vunpack.c.h.b16 %v118
    %v159 = vunpack.c.l.b16 %v119
    %v160 = vunpack.c.h.b16 %v119
    %v161 = vunpack.c.l.b16 %v120
    %v162 = vunpack.c.h.b16 %v120
    %v163 = vunpack.c.l.b16 %v121
    %v164 = vunpack.c.h.b16 %v121
    %v165 = vunpack.c.l.b16 %v122
    %v166 = vunpack.c.h.b16 %v122
    %v167 = vunpack.c.l.b16 %v123
    %v168 = vunpack.c.h.b16 %v123
    %v169 = vunpack.c.l.b16 %v124
    %v170 = vunpack.c.h.b16 %v124
    %v171 = vunpack.c.l.b16 %v125
    %v172 = vunpack.c.h.b16 %v125
    %v173 = vunpack.c.l.b16 %v126
    %v174 = vunpack.c.h.b16 %v126
    %v175 = vpack.c.b16 %v145, %v143
    %v176 = vpack.c.b16 %v146, %v144
    %v177 = vpack.c.b16 %v149, %v147
    %v178 = vpack.c.b16 %v150, %v148
    %v179 = vpack.c.b16 %v153, %v151
    %v180 = vpack.c.b16 %v154, %v152
    %v181 = vpack.c.b16 %v157, %v155
    %v182 = vpack.c.b16 %v158, %v156
    %v183 = vpack.c.b16 %v161, %v159
    %v184 = vpack.c.b16 %v162, %v160
    %v185 = vpack.c.b16 %v165, %v163
    %v186 = vpack.c.b16 %v166, %v164
    %v187 = vpack.c.b16 %v169, %v167
    %v188 = vpack.c.b16 %v170, %v168
    %v189 = vpack.c.b16 %v173, %v171
    %v190 = vpack.c.b16 %v174, %v172
    %207 = vmatprep.subr.bf16.mxu0 %v176
    %208 = vmatpush1.bf16.msra.mxu0 %v175
    %209 = vmatprep.subr.bf16.mxu0 %v178
    %210 = vmatpush1.bf16.msra.mxu0 %v177
    %211 = vmatprep.subr.bf16.mxu0 %v180
    %212 = vmatpush1.bf16.msra.mxu0 %v179
    %213 = vmatprep.subr.bf16.mxu0 %v182
    %214 = vmatpush1.bf16.msra.mxu0 %v181
    %215 = vmatprep.subr.bf16.mxu0 %v184
    %216 = vmatpush1.bf16.msra.mxu0 %v183
    %217 = vmatprep.subr.bf16.mxu0 %v186
    %218 = vmatpush1.bf16.msra.mxu0 %v185
    %219 = vmatprep.subr.bf16.mxu0 %v188
    %220 = vmatpush1.bf16.msra.mxu0 %v187
    %221 = vmatprep.subr.bf16.mxu0 %v190
    %222 = vmatpush1.bf16.msra.mxu0 %v189
    %223 = vmatprep.subr.bf16.mxu0 0
    %224 = vmatpush1.bf16.msra.mxu0 0
    %225 = vmatprep.subr.bf16.mxu0 0
    %226 = vmatpush1.bf16.msra.mxu0 0
    %227 = vmatprep.subr.bf16.mxu0 0
    %228 = vmatpush1.bf16.msra.mxu0 0
    %229 = vmatprep.subr.bf16.mxu0 0
    %230 = vmatpush1.bf16.msra.mxu0 0
    %231 = vmatprep.subr.bf16.mxu0 0
    %232 = vmatpush1.bf16.msra.mxu0 0
    %233 = vmatprep.subr.bf16.mxu0 0
    %234 = vmatpush1.bf16.msra.mxu0 0
    %235 = vmatprep.subr.bf16.mxu0 0
    %236 = vmatpush1.bf16.msra.mxu0 0
    %237 = vmatprep.subr.bf16.mxu0 0
    %238 = vmatpush1.bf16.msra.mxu0 0
    %239 = vmatprep.mubr.bf16.mxu0 0
    %240 = vmatmul.mubr.bf16.gmra.mrb[0].mxu0 %v110
    %v241 = vpop.f32.mrb[0].mxu0
    %v242 = vadd.f32 0.0, %v241
    %v243 = vpop.f32.mrb[0].mxu0
    %v244 = vadd.f32 0.0, %v243
    %v245 = vpop.f32.mrb[0].mxu0
    %v246 = vpop.f32.mrb[0].mxu0
    %247 = vdwg.mxu0
    %v248 = vmul.f32 %v242, %v242
    %v249 = vmul.f32 %v244, %v244
    %v250 = vadd.f32 %v248, %v249
    %v251 = vrsqrt.pop %v250
    %v252 = vmul.f32 %v250, %v251
    %vm253 = vcmp.eq.f32.partialorder %v250, inf
    %v254 = vsel %vm253, %v250, %v252
    %vm255 = vcmp.eq.f32.partialorder %v250, 0.0
    %v256 = vand.u32 %v250, 2147483648
    %v257 = vsel %vm255, %v256, %v254
    %v258 = vsel %vm109, %v257, 0.0
    %259 = vadd.xlane.f32.xlu0 %v258
    %v260 = vpop.xlane.xlu0 %259
    %v261 = vrcp.pop %v260
    %v262 = vmul.f32 %v258, %v261
    %v263 = vmax.f32 %v262, 1e-15
    %v264 = vsel %vm67, %v263, -inf
    %265 = vmax.xlane.f32.xlu0 %v264
    %v266 = vpop.xlane.xlu0 %265
    %v267 = vsub.f32 %v263, %v266
    %v268 = vmul.f32 %v267, 1.442695
    %v269 = vpow.pop %v268
    %v270 = vsel %vm67, %v269, 0.0
    %271 = vadd.xlane.f32.xlu0 %v270
    %v272 = vpop.xlane.xlu0 %271
    %v273 = vlog2.pop %v272
    %v274 = vmul.f32 %v273, 0.6931472
    %v275 = vsub.f32 %v267, %v274
    %v276 = vlog2.pop %v263
    %v277 = vmul.f32 %v276, 0.6931472
    %v279 = vrot.slane %v275, 4
    %v281 = vsub.f32 %v277, %v279
    %v282 = vmul.f32 %v263, %v281
    %v284 = vrot.slane %v282, 4
    %v286 = vsel %vm67, %v284, 0.0
    %287 = vadd.xlane.f32.xlu0 %v286
    %v288 = vpop.xlane.xlu0 %287
    %v289 = vrot.slane %v288, 4
    %v290 = vadd.f32 %v288, %v289
    %v291 = vrot.slane %v290, 2
    %v292 = vadd.f32 %v290, %v291
    %v293 = vrot.slane %v292, 1
    %v294 = vadd.f32 %v292, %v293
    %s295 = vtos %v294
    %v296 = vrcp.pop 512.0
    %s297 = vtos %v296
    %s298 = smul.f32 %s295, %s297
    %v299 = vlaneseq
    %v300 = vand.u32 %v299, 127
    %301 = vmax.xlane.f32.xlu0 %v263
    %v302 = vpop.xlane.xlu0 %301
    %vm303 = vcmp.eq.f32.partialorder %v263, %v302
    %v304 = vsel %vm303, %v300, 128
    %v305 = vand.u32 %v304, 65535
    %v306 = vshra.s32 %v304, 16
    %v307 = vcvt.s32.f32 %v305
    %v308 = vcvt.s32.f32 %v306
    %309 = vmin.xlane.f32.xlu0 %v308
    %v310 = vpop.xlane.xlu0 %309
    %vm311 = vcmp.eq.f32.partialorder %v308, %v310
    %v312 = vsel %vm311, %v307, inf
    %313 = vmin.xlane.f32.xlu0 %v312
    %v314 = vpop.xlane.xlu0 %313
    %v315 = vcvt.f32.s32 %v314
    %v316 = vcvt.f32.s32 %v310
    %v317 = vshll.u32 %v316, 16
    %v318 = vadd.s32 %v317, %v315
    %vm319 = vcmp.eq.s32.totalorder %v300, %v318
    %v320 = vsel %vm319, 1, 0
    %v321 = vcvt.s32.f32 %v320
    %v322 = vmul.f32 %v321, %v279
    %vm323 = vcmask 1047556
    %v324 = vsel %vm323, %v322, 0.0
    %325 = vadd.xlane.f32.xlu0 %v324
    %v326 = vpop.xlane.xlu0 %325
    %v328 = vrot.slane %v326, 4
    %v330 = vsel %vm78, %v328, 0.0
    %331 = vadd.xlane.f32.xlu0 %v330
    %v332 = vpop.xlane.xlu0 %331
    %v333 = vrot.slane %v332, 4
    %v334 = vadd.f32 %v332, %v333
    %v335 = vrot.slane %v334, 2
    %v336 = vadd.f32 %v334, %v335
    %v337 = vrot.slane %v336, 1
    %v338 = vadd.f32 %v336, %v337
    %s339 = vtos %v338
    %v340 = vrcp.pop 4.0
    %s341 = vtos %v340
    %s342 = smul.f32 %s339, %s341
    %s343 = ssub.f32 0.0, %s342
    %v345 = vrot.slane %v263, 4
    %v347 = vsub.f32 %v263, %v345
    %v348 = vmul.f32 %v347, %v347
    %v349 = vsel %vm67, %v348, 0.0
    %350 = vadd.xlane.f32.xlu0 %v349
    %v351 = vpop.xlane.xlu0 %350
    %v352 = vrot.slane %v351, 4
    %v353 = vadd.f32 %v351, %v352
    %v354 = vrot.slane %v353, 2
    %v355 = vadd.f32 %v353, %v354
    %v356 = vrot.slane %v355, 1
    %v357 = vadd.f32 %v355, %v356
    %s358 = vtos %v357
    %v359 = vrcp.pop 512.0
    %s360 = vtos %v359
    %s361 = smul.f32 %s358, %s360
    %s362 = smul.f32 %s52, %s91
    %s363 = sadd.f32 %s298, %s343
    %s364 = sadd.f32 %s363, %s361
    %s365 = smul.f32 %s53, %s364
    %s366 = sadd.f32 %s362, %s365
    %v367 = vcvt.s32.f32 %v318
    %v369 = vrot.slane %v367, 4
    %v371 = vsub.f32 %v367, %v369
    %v372 = vand.u32 2147483647, %v371
    %v373 = vsel %vm78, %v372, 0.0
    %374 = vadd.xlane.f32.xlu0 %v373
    %v375 = vpop.xlane.xlu0 %374
    %v376 = vrot.slane %v375, 4
    %v377 = vadd.f32 %v375, %v376
    %v378 = vrot.slane %v377, 2
    %v379 = vadd.f32 %v377, %v378
    %v380 = vrot.slane %v379, 1
    %v381 = vadd.f32 %v379, %v380
    %s382 = vtos %v381
    %v383 = vrcp.pop 4.0
    %s384 = vtos %v383
    %s385 = smul.f32 %s382, %s384
    %s386 = scalar_lea.smem [#allocation7], 0
    %387 = sst [smem:[%s386]] %s366
    %s388 = scalar_lea.smem [#allocation8], 0
    %389 = sst [smem:[%s388]] %s385
    // Predicated region
    $region30: #{_loss_impl.1} parent=1 // pred_check
      _
    $region31: #{_loss_impl.1} parent=1 // pred_check_branch
      %391 = sbr.rel (0) target = $region33
    $region32: #{_loss_impl.1} parent=1 // pred_region
      %s393 = ssub.s32 16, 16
      %394 = vsyncadd [#allocation4], %s393
      %397 = dma.smem_to_hbm [#allocation7], 16, %s5, [#allocation4]
    $region33: #{_loss_impl.1} parent=1 // pred_fallthru
      _
    // Predicated region
    $region34: #{_loss_impl.1} parent=1 // pred_check
      _
    $region35: #{_loss_impl.1} parent=1 // pred_check_branch
      %399 = sbr.rel (0) target = $region37
    $region36: #{_loss_impl.1} parent=1 // pred_region
      %s401 = ssub.s32 16, 16
      %402 = vsyncadd [#allocation9], %s401
      %405 = dma.smem_to_hbm [#allocation8], 16, %s6, [#allocation9]
    $region37: #{_loss_impl.1} parent=1 // pred_fallthru
      _
    // Predicated region
    $region38: #{_loss_impl.1} parent=1 // pred_check
      _
    $region39: #{_loss_impl.1} parent=1 // pred_check_branch
      %407 = sbr.rel (0) target = $region41
    $region40: #{_loss_impl.1} parent=1 // pred_region
      %408 = dma.done [#allocation4], 16
    $region41: #{_loss_impl.1} parent=1 // pred_fallthru
      _
    // Predicated region
    $region42: #{_loss_impl.1} parent=1 // pred_check
      _
    $region43: #{_loss_impl.1} parent=1 // pred_check_branch
      %410 = sbr.rel (0) target = $region45
    $region44: #{_loss_impl.1} parent=1 // pred_region
      %411 = dma.done [#allocation9], 16
    $region45: #{_loss_impl.1} parent=1 // pred_fallthru
      _
    %412 = sfence
    %413 = vsyncpa [#allocation3], 1
    %414 = vsyncpa [#allocation4], 1
    %415 = vsyncpa [#allocation9], 1
    %416 = vsyncpa [#allocation5], 1

</llo_original>
